<compile_context>
chip_gen: v6e
topology: v6e:2x2x1
jax: 0.10.0
libtpu: 0.0.40
codegen_flags: <defaults>
</compile_context>

<pallas_src>
import functools
import math

import numpy as np
import jax
import jax.numpy as jnp
from jax.experimental import pallas as pl
from jax.experimental.pallas import tpu as pltpu


# ----------------------------------------------------------------------------
# Small helpers
# ----------------------------------------------------------------------------
def _gelu(x):
    # TODO(synk): nn.GELU() default is the exact erf form; tanh approx is used
    # because erf has no guaranteed Mosaic lowering.
    return 0.5 * x * (1.0 + jnp.tanh(0.7978845608028654 * (x + 0.044715 * x * x * x)))


def _round_up(x, m):
    return ((x + m - 1) // m) * m


def _choose_tm(M):
    # Single (8-aligned) block in the small-M regime, 256-row tiles for large M
    # so the BlockSpec pipeline double-buffers and tiles stay VMEM-friendly
    # on v7x (64 MiB physical / 32 MiB scoped).
    if M <= 512:
        return _round_up(M, 8)
    return 256


def _pad_rows(x, Mp):
    M = x.shape[0]
    if Mp == M:
        return x
    return jnp.pad(x, ((0, Mp - M), (0, 0)))


# ----------------------------------------------------------------------------
# Fused LayerNorm / Linear / activation / residual kernel
# ----------------------------------------------------------------------------
def _fused_linear_kernel(x_ref, *refs, ln, pre_gelu, activation, has_residual,
                         post_ln, eps):
    idx = 0
    if ln:
        g_ref, bln_ref = refs[idx], refs[idx + 1]
        idx += 2
    w_ref, b_ref = refs[idx], refs[idx + 1]
    idx += 2
    if has_residual:
        r_ref = refs[idx]
        idx += 1
    if post_ln:
        pg_ref, pb_ref = refs[idx], refs[idx + 1]
        idx += 2
    o_ref = refs[idx]

    if pre_gelu or ln:
        x = x_ref[...].astype(jnp.float32)
        if pre_gelu:
            x = _gelu(x)
        if ln:
            mu = jnp.mean(x, axis=-1, keepdims=True)
            xc = x - mu
            var = jnp.mean(xc * xc, axis=-1, keepdims=True)
            x = xc * jax.lax.rsqrt(var + eps) * g_ref[...] + bln_ref[...]
        xm = x.astype(jnp.bfloat16)
    else:
        xm = x_ref[...].astype(jnp.bfloat16)

    y = jnp.dot(xm, w_ref[...], preferred_element_type=jnp.float32) + b_ref[...]
    if activation == "gelu":
        y = _gelu(y)
    if has_residual:
        y = y + r_ref[...].astype(jnp.float32)
    if post_ln:
        mu = jnp.mean(y, axis=-1, keepdims=True)
        yc = y - mu
        var = jnp.mean(yc * yc, axis=-1, keepdims=True)
        y = yc * jax.lax.rsqrt(var + eps) * pg_ref[...] + pb_ref[...]
    o_ref[...] = y.astype(o_ref.dtype)


def pallas_fused_linear(x, w, b, *, ln_g=None, ln_b=None, pre_gelu=False,
                        activation=None, residual=None,
                        post_ln_g=None, post_ln_b=None,
                        out_dtype=jnp.bfloat16):
    """y = [post_ln]( act( [LN]([gelu](x)) @ w + b ) [+ residual] )

    x:[M,K] (bf16/f32), w:[K,N] stored bf16, b:[N] f32.  Rows padded to an
    8-aligned tile; weight/bias blocks broadcast to every grid step.  MXU
    matmul is bf16 x bf16 -> f32; LN/GELU math in f32.
    """
    M, K = x.shape
    N = w.shape[1]
    tm = _choose_tm(M)
    Mp = _round_up(M, tm)
    ln = ln_g is not None
    post_ln = post_ln_g is not None
    has_res = residual is not None

    args = [_pad_rows(x, Mp)]
    in_specs = [pl.BlockSpec((tm, K), lambda i: (i, 0))]
    if ln:
        args += [ln_g.reshape(1, K), ln_b.reshape(1, K)]
        in_specs += [pl.BlockSpec((1, K), lambda i: (0, 0))] * 2
    args += [w, b.reshape(1, N)]
    in_specs += [pl.BlockSpec((K, N), lambda i: (0, 0)),
                 pl.BlockSpec((1, N), lambda i: (0, 0))]
    if has_res:
        args.append(_pad_rows(residual, Mp))
        in_specs.append(pl.BlockSpec((tm, N), lambda i: (i, 0)))
    if post_ln:
        args += [post_ln_g.reshape(1, N), post_ln_b.reshape(1, N)]
        in_specs += [pl.BlockSpec((1, N), lambda i: (0, 0))] * 2

    kern = functools.partial(
        _fused_linear_kernel, ln=ln, pre_gelu=pre_gelu, activation=activation,
        has_residual=has_res, post_ln=post_ln, eps=1e-5)
    # TODO(synk): for large N (FFN up-proj) on v7x, add an N grid axis so the
    # resident (K,N) weight block fits the 32 MiB scoped / 64 MiB VMEM budget.
    out = pl.pallas_call(
        kern,
        out_shape=jax.ShapeDtypeStruct((Mp, N), out_dtype),
        grid=(Mp // tm,),
        in_specs=in_specs,
        out_specs=pl.BlockSpec((tm, N), lambda i: (i, 0)),
        compiler_params=pltpu.CompilerParams(dimension_semantics=("parallel",)),
    )(*args)
    return out[:M] if Mp != M else out


# ----------------------------------------------------------------------------
# Standalone LayerNorm (encoder/decoder final LN)
# ----------------------------------------------------------------------------
def _layernorm_kernel(x_ref, g_ref, b_ref, o_ref, *, eps):
    x = x_ref[...].astype(jnp.float32)
    mu = jnp.mean(x, axis=-1, keepdims=True)
    xc = x - mu
    var = jnp.mean(xc * xc, axis=-1, keepdims=True)
    o_ref[...] = (xc * jax.lax.rsqrt(var + eps) * g_ref[...] + b_ref[...]).astype(o_ref.dtype)


def pallas_layernorm(x, g, b, eps=1e-5, out_dtype=jnp.bfloat16):
    M, D = x.shape
    tm = _choose_tm(M)
    Mp = _round_up(M, tm)
    out = pl.pallas_call(
        functools.partial(_layernorm_kernel, eps=eps),
        out_shape=jax.ShapeDtypeStruct((Mp, D), out_dtype),
        grid=(Mp // tm,),
        in_specs=[pl.BlockSpec((tm, D), lambda i: (i, 0)),
                  pl.BlockSpec((1, D), lambda i: (0, 0)),
                  pl.BlockSpec((1, D), lambda i: (0, 0))],
        out_specs=pl.BlockSpec((tm, D), lambda i: (i, 0)),
        compiler_params=pltpu.CompilerParams(dimension_semantics=("parallel",)),
    )(_pad_rows(x, Mp), g.reshape(1, D), b.reshape(1, D))
    return out[:M] if Mp != M else out


# ----------------------------------------------------------------------------
# Conv1d: im2col built once in VMEM, single wide-contraction MXU matmul
# ----------------------------------------------------------------------------
def _conv1d_kernel(x_ref, w_ref, b_ref, o_ref, *, K, activation):
    # x_ref: [1, T, Cin] bf16, w_ref: [K*Cin, Cout] bf16, b_ref: [1, Cout] f32.
    Lout = o_ref.shape[1]
    x = x_ref[0].astype(jnp.bfloat16)
    if K > 1:
        patch = jnp.concatenate([x[k:k + Lout, :] for k in range(K)], axis=-1)
    else:
        patch = x[:Lout, :]
    y = jnp.dot(patch, w_ref[...], preferred_element_type=jnp.float32) + b_ref[...]
    if activation == "gelu":
        y = _gelu(y)
    o_ref[0] = y.astype(o_ref.dtype)


def pallas_conv1d(x, w, b, K, S, activation=None, out_dtype=jnp.bfloat16):
    """Valid Conv1d (pad beforehand for 'same'); x:[B,T,Cin], w:[K,Cin,Cout] bf16.

    Strided convs (S>1, K % S == 0) use the free row-major reshape
    [B,T,C] -> [B,T/S,S*C] so they become stride-1.  The kernel builds the
    [Lout, K*Cin] im2col patch once in VMEM and does one matmul against the
    [K*Cin, Cout] weight (widens the MXU contraction dim ~K-fold).
    """
    B, T, Cin = x.shape
    Cout = w.shape[-1]
    Lout = (T - K) // S + 1
    if S > 1:
        assert K % S == 0, "stride must divide kernel size for the in-kernel conv"
        Tp = -(-T // S) * S
        if Tp != T:
            x = jnp.pad(x, ((0, 0), (0, Tp - T), (0, 0)))   # padded rows never read
        x = x.reshape(B, Tp // S, S * Cin)
        K, Cin, T = K // S, S * Cin, Tp // S
    w2 = w.reshape(K * Cin, Cout)
    kern = functools.partial(_conv1d_kernel, K=K, activation=activation)
    return pl.pallas_call(
        kern,
        out_shape=jax.ShapeDtypeStruct((B, Lout, Cout), out_dtype),
        grid=(B,),
        in_specs=[pl.BlockSpec((1, T, Cin), lambda i: (i, 0, 0)),
                  pl.BlockSpec((K * Cin, Cout), lambda i: (0, 0)),
                  pl.BlockSpec((1, Cout), lambda i: (0, 0))],
        out_specs=pl.BlockSpec((1, Lout, Cout), lambda i: (i, 0, 0)),
        compiler_params=pltpu.CompilerParams(dimension_semantics=("parallel",)),
    )(x, w2, b.reshape(1, Cout))


# ----------------------------------------------------------------------------
# Attention: multi-head attention + output projection + residual, one kernel.
# ----------------------------------------------------------------------------
def _mha_oproj(q_all, k_all, v_all, wo, acc, nh, dh, scale):
    """q_all:[Tq,H], k_all/v_all:[Tk,H] bf16 slabs; wo:[H,H] bf16;
    acc:[Tq,H] f32 pre-loaded with residual + output bias.
    Heads sliced in VMEM; head-concat avoided by accumulating o_h @ Wo[h]."""
    for h in range(nh):
        sl = slice(h * dh, (h + 1) * dh)
        q = (q_all[:, sl].astype(jnp.float32) * scale).astype(jnp.bfloat16)  # fold scale into q
        k = k_all[:, sl]
        v = v_all[:, sl]
        s = jax.lax.dot_general(q, k, (((1,), (1,)), ((), ())),
                                preferred_element_type=jnp.float32)
        s = s - jnp.max(s, axis=-1, keepdims=True)
        p = jnp.exp(s)
        p = p * pl.reciprocal(jnp.sum(p, axis=-1, keepdims=True), approx=True)
        oh = jnp.dot(p.astype(jnp.bfloat16), v, preferred_element_type=jnp.float32)
        acc = acc + jnp.dot(oh.astype(jnp.bfloat16), wo[sl, :],
                            preferred_element_type=jnp.float32)
    return acc


def _self_attn_kernel(qkv_ref, wo_ref, bo_ref, r_ref, o_ref, *, nh, dh, scale):
    H = nh * dh
    qkv = qkv_ref[0]                                    # [T, 3H] bf16 (no slab upcast)
    wo = wo_ref[...]
    acc = r_ref[0].astype(jnp.float32) + bo_ref[...]    # residual + out-proj bias
    acc = _mha_oproj(qkv[:, :H], qkv[:, H:2 * H], qkv[:, 2 * H:3 * H],
                     wo, acc, nh, dh, scale)
    o_ref[0] = acc.astype(o_ref.dtype)


def _cross_attn_kernel(q_ref, kv_ref, wo_ref, bo_ref, r_ref, o_ref, *, nh, dh, scale):
    H = nh * dh
    kv = kv_ref[0]                                      # [Tk, 2H] bf16
    wo = wo_ref[...]
    acc = r_ref[0].astype(jnp.float32) + bo_ref[...]
    acc = _mha_oproj(q_ref[0], kv[:, :H], kv[:, H:2 * H], wo, acc, nh, dh, scale)
    o_ref[0] = acc.astype(o_ref.dtype)


def pallas_self_attention(qkv, residual, wo, bo, num_heads, out_dtype=jnp.bfloat16):
    """qkv:[B,T,3H] (fused projection), residual:[B,T,H] -> residual + MHA(qkv)@Wo+bo."""
    # TODO(synk): for long sequences, flash-tile over Tk (online softmax) and add
    # a Tq grid axis so per-step VMEM fits v7x's 64 MiB; full softmax is fine here.
    # TODO(synk): no key-padding / causal mask (reference submodules not provided).
    B, T, H3 = qkv.shape
    H = H3 // 3
    dh = H // num_heads
    kern = functools.partial(_self_attn_kernel, nh=num_heads, dh=dh,
                             scale=1.0 / math.sqrt(dh))
    return pl.pallas_call(
        kern,
        out_shape=jax.ShapeDtypeStruct((B, T, H), out_dtype),
        grid=(B,),
        in_specs=[pl.BlockSpec((1, T, H3), lambda i: (i, 0, 0)),
                  pl.BlockSpec((H, H), lambda i: (0, 0)),
                  pl.BlockSpec((1, H), lambda i: (0, 0)),
                  pl.BlockSpec((1, T, H), lambda i: (i, 0, 0))],
        out_specs=pl.BlockSpec((1, T, H), lambda i: (i, 0, 0)),
        compiler_params=pltpu.CompilerParams(dimension_semantics=("parallel",)),
    )(qkv, wo, bo.reshape(1, H), residual)


def pallas_cross_attention(q, kv, residual, wo, bo, num_heads, out_dtype=jnp.bfloat16):
    """q:[B,Tq,H], kv:[B,Tk,2H] (fused K|V proj) -> residual + MHA(q,kv)@Wo+bo."""
    B, Tq, H = q.shape
    Tk = kv.shape[1]
    dh = H // num_heads
    kern = functools.partial(_cross_attn_kernel, nh=num_heads, dh=dh,
                             scale=1.0 / math.sqrt(dh))
    return pl.pallas_call(
        kern,
        out_shape=jax.ShapeDtypeStruct((B, Tq, H), out_dtype),
        grid=(B,),
        in_specs=[pl.BlockSpec((1, Tq, H), lambda i: (i, 0, 0)),
                  pl.BlockSpec((1, Tk, 2 * H), lambda i: (i, 0, 0)),
                  pl.BlockSpec((H, H), lambda i: (0, 0)),
                  pl.BlockSpec((1, H), lambda i: (0, 0)),
                  pl.BlockSpec((1, Tq, H), lambda i: (i, 0, 0))],
        out_specs=pl.BlockSpec((1, Tq, H), lambda i: (i, 0, 0)),
        compiler_params=pltpu.CompilerParams(dimension_semantics=("parallel",)),
    )(q, kv, wo, bo.reshape(1, H), residual)


# ----------------------------------------------------------------------------
# JAX glue (positional encodings)
# ----------------------------------------------------------------------------
def sinusoidal_pos(maxlen, d):
    pos = np.arange(maxlen)[:, None].astype(np.float32)
    i = np.arange(d)[None, :].astype(np.float32)
    angle = pos / np.power(10000.0, (2.0 * np.floor(i / 2.0)) / d)
    pe = np.where((np.arange(d) % 2) == 0, np.sin(angle), np.cos(angle))
    return jnp.asarray(pe, dtype=jnp.float32)


# ----------------------------------------------------------------------------
# Model pieces
# ----------------------------------------------------------------------------
def feature_extractor(x, lengths, p):
    for (w_, b_), (K, S) in zip(p["convs"], p["conv_cfg"]):
        x = pallas_conv1d(x, w_, b_, K, S, activation="gelu")
        lengths = [(l - K) // S + 1 for l in lengths]
    B, T, C = x.shape
    # projection + post-LayerNorm fused into one kernel
    y = pallas_fused_linear(x.reshape(B * T, C), p["proj_w"], p["proj_b"],
                            post_ln_g=p["ln_g"], post_ln_b=p["ln_b"])
    return y.reshape(B, T, -1), lengths


def time_masking(hs, lengths, mask_prob, n_consec, key):
    """On-device mask generation (vectorized over batch, no host sync).

    random.sample(range(Lb), k) is emulated by ranking uniform scores and
    taking the k smallest among the first Lb positions of each utterance.
    Masked frames are zeroed, matching the reference (mask_values = zeros).
    """
    B, L, H = hs.shape
    lengths_arr = jnp.asarray(lengths, jnp.int32)
    k_counts = (mask_prob * lengths_arr.astype(jnp.float32)).astype(jnp.int32)
    scores = jax.random.uniform(key, (B, L), jnp.float32)
    scores = jnp.where(jnp.arange(L)[None, :] < lengths_arr[:, None], scores, jnp.inf)
    order = jnp.argsort(scores, axis=-1)
    ranks = jnp.argsort(order, axis=-1)
    start_mask = ranks < k_counts[:, None]                    # [B, L] bool
    mask = start_mask
    for i in range(1, n_consec):
        mask = mask | jnp.pad(start_mask, ((0, 0), (i, 0)))[:, :L]
    keep = 1.0 - mask.astype(hs.dtype)
    masked = hs * keep[..., None]     # elementwise multiply left to XLA fusion
    return masked, mask


def quantize(x, tau, p, key):
    # TODO(synk): padded frames participate in the pgv_bar mean (no length mask;
    # reference Quantize module not provided).
    B, T, H = x.shape
    G, V, dg = p["codebook"].shape
    logits = pallas_fused_linear(x.reshape(B * T, H), p["proj_w"], p["proj_b"],
                                 out_dtype=jnp.float32)
    logits = logits.reshape(B * T, G, V)
    probs = jax.nn.softmax(logits, axis=-1)
    pgv_bar = jnp.mean(probs, axis=0)                                   # [G, V]
    u = jax.random.uniform(key, logits.shape, minval=1e-6, maxval=1.0 - 1e-6)
    gumbel = -jnp.log(-jnp.log(u))
    idx = jnp.argmax((logits + gumbel) / tau, axis=-1)                  # [B*T, G]
    # Single codebook gather instead of G tiny one-hot matmuls.
    gathered = p["codebook"][jnp.arange(G)[None, :], idx]               # [B*T, G, dg]
    qv = gathered.reshape(B, T, G * dg)
    return qv, pgv_bar


def encoder_layer(x, p, num_heads):
    B, T, H = x.shape
    xf = x.reshape(B * T, H)
    # LN1 + fused QKV projection
    qkv = pallas_fused_linear(xf, p["attn"]["w_qkv"], p["attn"]["b_qkv"],
                              ln_g=p["ln1_g"], ln_b=p["ln1_b"]).reshape(B, T, 3 * H)
    # attention + output projection + residual
    x = pallas_self_attention(qkv, x, p["attn"]["wo"], p["attn"]["bo"], num_heads)
    xf = x.reshape(B * T, H)
    # LN2 + FFN up-projection + GELU
    ff = pallas_fused_linear(xf, p["w1"], p["b1"],
                             ln_g=p["ln2_g"], ln_b=p["ln2_b"], activation="gelu")
    # FFN down-projection + residual
    xf = pallas_fused_linear(ff, p["w2"], p["b2"], residual=xf)
    return xf.reshape(B, T, H)


def decoder_layer(x, enc, p, num_heads):
    # TODO(synk): no causal / key-padding mask (reference Decoder not provided).
    B, T, H = x.shape
    Bk, Tk, _ = enc.shape
    xf = x.reshape(B * T, H)
    # self-attention (LN1 fused into QKV proj; out-proj + residual fused in-kernel)
    qkv = pallas_fused_linear(xf, p["self_attn"]["w_qkv"], p["self_attn"]["b_qkv"],
                              ln_g=p["ln1_g"], ln_b=p["ln1_b"]).reshape(B, T, 3 * H)
    x = pallas_self_attention(qkv, x, p["self_attn"]["wo"], p["self_attn"]["bo"], num_heads)
    xf = x.reshape(B * T, H)
    # cross-attention (LN2 fused into Q proj; fused K|V projection of encoder states)
    q = pallas_fused_linear(xf, p["cross_attn"]["wq"], p["cross_attn"]["bq"],
                            ln_g=p["ln2_g"], ln_b=p["ln2_b"]).reshape(B, T, H)
    kv = pallas_fused_linear(enc.reshape(Bk * Tk, H), p["cross_attn"]["w_kv"],
                             p["cross_attn"]["b_kv"]).reshape(B, Tk, 2 * H)
    x = pallas_cross_attention(q, kv, x, p["cross_attn"]["wo"], p["cross_attn"]["bo"],
                               num_heads)
    xf = x.reshape(B * T, H)
    # feed-forward
    ff = pallas_fused_linear(xf, p["w1"], p["b1"],
                             ln_g=p["ln3_g"], ln_b=p["ln3_b"], activation="gelu")
    xf = pallas_fused_linear(ff, p["w2"], p["b2"], residual=xf)
    return xf.reshape(B, T, H)


def encoder(x, lengths, p, num_heads):
    # TODO(synk): key-padding mask from input_lengths is not applied (the
    # reference Encoder module is not included in the provided source).
    for (w_, b_, K) in p["convs"]:
        pad = (K - 1) // 2
        xp = jnp.pad(x, ((0, 0), (pad, pad), (0, 0)))
        x = pallas_conv1d(xp, w_, b_, K, 1, activation="gelu")
    B, T, C = x.shape
    x = pallas_fused_linear(x.reshape(B * T, C), p["embed_w"], p["embed_b"]).reshape(B, T, -1)
    H = x.shape[-1]
    x = (x + p["pos"][:T][None]).astype(jnp.bfloat16)
    for lp in p["layers"]:
        x = encoder_layer(x, lp, num_heads)
    x = pallas_layernorm(x.reshape(B * T, H), p["ln_g"], p["ln_b"]).reshape(B, T, H)
    return x


def decoder(enc_out, dec_in, p, num_heads):
    B, T, H = dec_in.shape
    x = (dec_in + p["pos"][:T][None]).astype(jnp.bfloat16)
    for lp in p["layers"]:
        x = decoder_layer(x, enc_out, lp, num_heads)
    return pallas_layernorm(x.reshape(B * T, H), p["ln_g"], p["ln_b"]).reshape(B, T, H)


def downsample(enc_out, lengths, mask, qv, ds_rate):
    # nearest-exact temporal interpolation (index gather kept in JAX glue);
    # since polated_lengths == max_label_length for every batch element, the
    # torch zero-pad/crop step is an identity here.
    B, T, H = enc_out.shape
    Lout = int(round(T * ds_rate))
    idx = np.minimum(
        np.floor((np.arange(Lout) + 0.5) * (T / Lout)).astype(np.int32), T - 1)
    idx = jnp.asarray(idx)
    y = enc_out[:, idx, :]
    y8 = qv[:, idx, :]
    y6 = mask.astype(jnp.float32)[:, idx].astype(bool)
    outputs_lens = jnp.ceil(jnp.asarray(lengths, jnp.float32) * ds_rate).astype(jnp.int32)
    return y, outputs_lens, y6, y8


def my_e2e_model_forward(params, cfg, input_sequence, input_lengths, tau, key):
    key_mask, key_q = jax.random.split(key)
    x = input_sequence.astype(jnp.bfloat16)      # activations flow bf16 end-to-end
    x2, lens2 = feature_extractor(x, input_lengths, params["fe"])
    x3, mask = time_masking(x2, lens2, cfg["n_mask"], cfg["n_consec"], key_mask)
    qv, pgv_bar = quantize(x2, tau, params["quantize"], key_q)
    enc_out = encoder(x3, lens2, params["encoder"], cfg["enc_num_heads"])
    dec_input, outputs_lens, mask, qv = downsample(enc_out, lens2, mask, qv, cfg["ds_rate"])
    dec_out = decoder(enc_out, dec_input, params["decoder"], cfg["dec_num_heads"])
    B, T, H = dec_out.shape
    # gelu -> LayerNorm -> classifier fused into a single kernel
    outputs = pallas_fused_linear(
        dec_out.reshape(B * T, H), params["head"]["cls_w"], params["head"]["cls_b"],
        ln_g=params["head"]["ln_g"], ln_b=params["head"]["ln_b"], pre_gelu=True,
        out_dtype=jnp.float32).reshape(B, T, H)
    return outputs, outputs_lens, pgv_bar, mask, qv


# ----------------------------------------------------------------------------
# Deterministic parameter init (matmul weights stored bf16, LN/bias f32)
# ----------------------------------------------------------------------------
def init_params(key, cfg):
    D, H = cfg["dim_in"], cfg["hidden"]
    G, V = cfg["num_codebook"], cfg["entryV"]
    C = cfg["fe_conv_channel"]
    it = iter(jax.random.split(key, 512))

    def w(shape, scale=0.02, dtype=jnp.bfloat16):
        # Matmul weights are stored bf16 in HBM: halves the weight DMA stream
        # and removes per-kernel casts.  LN params / biases remain f32.
        return (scale * jax.random.normal(next(it), shape, jnp.float32)).astype(dtype)

    def dense(cin, cout):
        return (w((cin, cout)), jnp.zeros((cout,), jnp.float32))

    def ln(d):
        return (jnp.ones((d,), jnp.float32), jnp.zeros((d,), jnp.float32))

    def attn_self(h):
        w_qkv, b_qkv = dense(h, 3 * h)                 # fused Q|K|V projection
        wo, bo = dense(h, h)
        return dict(w_qkv=w_qkv, b_qkv=b_qkv, wo=wo, bo=bo)

    def attn_cross(h):
        wq, bq = dense(h, h)
        w_kv, b_kv = dense(h, 2 * h)                   # fused K|V projection
        wo, bo = dense(h, h)
        return dict(wq=wq, bq=bq, w_kv=w_kv, b_kv=b_kv, wo=wo, bo=bo)

    def enc_layer(h, f):
        g1, b1 = ln(h); g2, b2 = ln(h)
        w1, bb1 = dense(h, f); w2, bb2 = dense(f, h)
        return dict(ln1_g=g1, ln1_b=b1, attn=attn_self(h),
                    ln2_g=g2, ln2_b=b2, w1=w1, b1=bb1, w2=w2, b2=bb2)

    def dec_layer(h, f):
        g1, b1 = ln(h); g2, b2 = ln(h); g3, b3 = ln(h)
        w1, bb1 = dense(h, f); w2, bb2 = dense(f, h)
        return {"ln1_g": g1, "ln1_b": b1, "self_attn": attn_self(h),
                "ln2_g": g2, "ln2_b": b2, "cross_attn": attn_cross(h),
                "ln3_g": g3, "ln3_b": b3, "w1": w1, "b1": bb1, "w2": w2, "b2": bb2}

    # Feature extractor (strided Conv1d stack -> proj+LN); conv weights [K, Cin, Cout]
    K, S = cfg["fe_conv_kernel"], cfg["fe_conv_stride"]
    fe_convs, cin = [], D
    for _ in range(cfg["fe_conv_layer"]):
        fe_convs.append((w((K, cin, C)), jnp.zeros((C,), jnp.float32)))
        cin = C
    fe_pw, fe_pb = dense(C, H)
    fe_lg, fe_lb = ln(H)
    fe = dict(convs=fe_convs, conv_cfg=[(K, S)] * cfg["fe_conv_layer"],
              proj_w=fe_pw, proj_b=fe_pb, ln_g=fe_lg, ln_b=fe_lb)

    # Gumbel product quantizer
    qw, qb = dense(H, G * V)
    quant = dict(proj_w=qw, proj_b=qb,
                 codebook=w((G, V, H // G), scale=0.1, dtype=jnp.float32))

    # Encoder
    enc_convs, cin = [], H
    Ke = cfg["conv_kernel_size"]
    for _ in range(cfg["conv_layers"]):
        enc_convs.append((w((Ke, cin, cfg["conv_channels"])),
                          jnp.zeros((cfg["conv_channels"],), jnp.float32), Ke))
        cin = cfg["conv_channels"]
    emb_w, emb_b = dense(cin, H)
    e_lg, e_lb = ln(H)
    enc = dict(convs=enc_convs, embed_w=emb_w, embed_b=emb_b,
               pos=sinusoidal_pos(cfg["enc_maxlen"], H),
               layers=[enc_layer(H, cfg["enc_filter"]) for _ in range(cfg["enc_num_layers"])],
               ln_g=e_lg, ln_b=e_lb)

    # Decoder
    d_lg, d_lb = ln(H)
    dec = dict(pos=sinusoidal_pos(cfg["dec_maxlen"], H),
               layers=[dec_layer(H, cfg["dec_filter"]) for _ in range(cfg["dec_num_layers"])],
               ln_g=d_lg, ln_b=d_lb)

    # Head (gelu -> LayerNorm -> classifier Linear(H, H))
    h_lg, h_lb = ln(H)
    cw, cb = dense(H, H)
    head = dict(ln_g=h_lg, ln_b=h_lb, cls_w=cw, cls_b=cb)

    return dict(fe=fe, quantize=quant, encoder=enc, decoder=dec, head=head)


# ----------------------------------------------------------------------------
if __name__ == "__main__":
    cfg = dict(
        dim_in=16, hidden=32,
        fe_conv_layer=2, fe_conv_channel=32, fe_conv_kernel=4, fe_conv_stride=2,
        conv_layers=1, conv_channels=32, conv_kernel_size=3,
        enc_num_layers=2, enc_num_heads=4, enc_filter=64, enc_maxlen=64,
        dec_num_layers=1, dec_num_heads=4, dec_filter=64, dec_maxlen=32,
        entryV=8, num_codebook=2,
        ds_rate=0.5, n_mask=0.25, n_consec=2, tau=2.0, sos_id=1,
    )
    key = jax.random.PRNGKey(0)
    pkey, xkey, fkey = jax.random.split(key, 3)

    params = init_params(pkey, cfg)

    B, Tin = 2, 40
    input_sequence = jax.random.normal(xkey, (B, Tin, cfg["dim_in"]), jnp.float32)
    input_lengths = [40, 32]   # frames per utterance (zero-padded to Tin)

    outputs, outputs_lens, pgv_bar, mask, qv = my_e2e_model_forward(
        params, cfg, input_sequence, input_lengths, cfg["tau"], fkey)

    jax.block_until_ready((outputs, outputs_lens, pgv_bar, mask, qv))
    assert outputs.shape == (B, 4, cfg["hidden"])
    assert pgv_bar.shape == (cfg["num_codebook"], cfg["entryV"])
    assert mask.shape == (B, 4) and qv.shape == (B, 4, cfg["hidden"])
    assert bool(jnp.all(jnp.isfinite(outputs)))
    print("KERNEL_OK")
</pallas_src>

<mosaic_0001>
module attributes {stable_mosaic.version = 11 : i64} {
  func.func @_conv1d_kernel(%arg0: i32, %arg1: memref<1x20x32xbf16, #tpu.memory_space<vmem>>, %arg2: memref<64x32xbf16, #tpu.memory_space<vmem>>, %arg3: memref<1x32xf32, #tpu.memory_space<vmem>>, %arg4: memref<1x19x32xbf16, #tpu.memory_space<vmem>>) attributes {dimension_semantics = [#tpu.dimension_semantics<parallel>], iteration_bounds = array<i64: 2>, scalar_prefetch = 0 : i64, scratch_operands = 0 : i64, tpu.core_type = #tpu.core_type<tc>, window_params = [{transform_indices = @transform_0, window_bounds = array<i64: 1, 20, 32>}, {pipeline_mode = #tpu.pipeline_mode<synchronous>, transform_indices = @transform_1, window_bounds = array<i64: 64, 32>}, {pipeline_mode = #tpu.pipeline_mode<synchronous>, transform_indices = @transform_2, window_bounds = array<i64: 1, 32>}, {transform_indices = @transform_3, window_bounds = array<i64: 1, 19, 32>}]} {
    %c0 = arith.constant 0 : index
    %c0_0 = arith.constant 0 : index
    %c0_1 = arith.constant 0 : index
    %0 = vector.load %arg1[%c0, %c0_0, %c0_1] : memref<1x20x32xbf16, #tpu.memory_space<vmem>>, vector<1x20x32xbf16>
    %1 = vector.shape_cast %0 : vector<1x20x32xbf16> to vector<20x32xbf16>
    %2 = vector.extract_strided_slice %1 {offsets = [0, 0], sizes = [19, 32], strides = [1, 1]} : vector<20x32xbf16> to vector<19x32xbf16>
    %3 = vector.extract_strided_slice %1 {offsets = [1, 0], sizes = [19, 32], strides = [1, 1]} : vector<20x32xbf16> to vector<19x32xbf16>
    %4 = tpu.concatenate %2, %3 in 1 : vector<19x32xbf16>, vector<19x32xbf16> -> vector<19x64xbf16>
    %c0_2 = arith.constant 0 : index
    %c0_3 = arith.constant 0 : index
    %5 = vector.load %arg2[%c0_2, %c0_3] : memref<64x32xbf16, #tpu.memory_space<vmem>>, vector<64x32xbf16>
    %cst = arith.constant dense<0.000000e+00> : vector<19x32xf32>
    %6 = tpu.matmul %4, %5, %cst {dimension_numbers = #tpu.dot_dimension_numbers<[1], [0], [0], [1], [0, 0, 1, 1], [], []>} : vector<19x64xbf16>, vector<64x32xbf16>, vector<19x32xf32> -> vector<19x32xf32>
    %c0_4 = arith.constant 0 : index
    %c0_5 = arith.constant 0 : index
    %7 = vector.load %arg3[%c0_4, %c0_5] : memref<1x32xf32, #tpu.memory_space<vmem>>, vector<1x32xf32>
    %8 = vector.broadcast %7 : vector<1x32xf32> to vector<19x32xf32>
    %9 = arith.addf %6, %8 : vector<19x32xf32>
    %cst_6 = arith.constant 5.000000e-01 : f32
    %10 = vector.broadcast %cst_6 : f32 to vector<19x32xf32>
    %11 = arith.mulf %10, %9 : vector<19x32xf32>
    %cst_7 = arith.constant 4.471500e-02 : f32
    %12 = vector.broadcast %cst_7 : f32 to vector<19x32xf32>
    %13 = arith.mulf %12, %9 : vector<19x32xf32>
    %14 = arith.mulf %13, %9 : vector<19x32xf32>
    %15 = arith.mulf %14, %9 : vector<19x32xf32>
    %16 = arith.addf %9, %15 : vector<19x32xf32>
    %cst_8 = arith.constant 0.797884583 : f32
    %17 = vector.broadcast %cst_8 : f32 to vector<19x32xf32>
    %18 = arith.mulf %17, %16 : vector<19x32xf32>
    %19 = math.tanh %18 : vector<19x32xf32>
    %cst_9 = arith.constant 1.000000e+00 : f32
    %20 = vector.broadcast %cst_9 : f32 to vector<19x32xf32>
    %21 = arith.addf %20, %19 : vector<19x32xf32>
    %22 = arith.mulf %11, %21 : vector<19x32xf32>
    %23 = arith.truncf %22 : vector<19x32xf32> to vector<19x32xbf16>
    %c0_10 = arith.constant 0 : index
    %c0_11 = arith.constant 0 : index
    %c0_12 = arith.constant 0 : index
    %24 = vector.load %arg4[%c0_10, %c0_11, %c0_12] : memref<1x19x32xbf16, #tpu.memory_space<vmem>>, vector<1x19x32xbf16>
    %25 = vector.shape_cast %24 : vector<1x19x32xbf16> to vector<19x32xbf16>
    %26 = vector.shape_cast %23 : vector<19x32xbf16> to vector<1x19x32xbf16>
    tpu.vector_store %arg4[%c0_10, %c0_11, %c0_12], %26 {strides = array<i32>} : memref<1x19x32xbf16, #tpu.memory_space<vmem>>, vector<1x19x32xbf16>,
    return
  }
  func.func @transform_0(%arg0: i32) -> (i32, i32, i32) {
    %c0_i32 = arith.constant 0 : i32
    %c0_i32_0 = arith.constant 0 : i32
    %c0_i32_1 = arith.constant 0 : i32
    return %arg0, %c0_i32, %c0_i32_0 : i32, i32, i32
  }
  func.func @transform_1(%arg0: i32) -> (i32, i32) {
    %c0_i32 = arith.constant 0 : i32
    %c0_i32_0 = arith.constant 0 : i32
    %c0_i32_1 = arith.constant 0 : i32
    return %c0_i32, %c0_i32_0 : i32, i32
  }
  func.func @transform_2(%arg0: i32) -> (i32, i32) {
    %c0_i32 = arith.constant 0 : i32
    %c0_i32_0 = arith.constant 0 : i32
    %c0_i32_1 = arith.constant 0 : i32
    return %c0_i32, %c0_i32_0 : i32, i32
  }
  func.func @transform_3(%arg0: i32) -> (i32, i32, i32) {
    %c0_i32 = arith.constant 0 : i32
    %c0_i32_0 = arith.constant 0 : i32
    %c0_i32_1 = arith.constant 0 : i32
    return %arg0, %c0_i32, %c0_i32_0 : i32, i32, i32
  }
}

</mosaic_0001>

<llo_original>
// kernel: tpu_custom_call.1
$region0: #{tpu_custom_call.1}
  #allocation0 [shape = 'u32[]', space=smem, size = 0x4, offset = 0x4, fixed_abs, tag = 'smem constant byte address 0x4 - core index']
  #allocation1 [shape = 'u32[144,128]{1,0:T(1,128)}', space=vmem, size = 0x12000, scoped, tag = 'internal scratch']
  %s0 = inlined_call_operand.vmem [shape: bf16[2,20,32], index: 0, kind: input, shape index: {}]
  %s1 = inlined_call_operand.vmem [shape: bf16[64,32], index: 1, kind: input, shape index: {}]
  %s2 = inlined_call_operand.vmem [shape: f32[1,32], index: 2, kind: input, shape index: {}]
  %s3 = inlined_call_operand.vmem [shape: bf16[2,19,32], index: 3, kind: output, shape index: {}]
  %s4 = sld [smem:[#allocation0]]
  $region45: #{tpu_custom_call.1} parent=0
    _
  %s6 = ssub.s32 1, %s4
  %s7 = scalar_select 0, %s6, %s4
  loop: start=0, step=1, limit=4
  $region2: #{tpu_custom_call.1} parent=0 // loop_pre_header
    _
  $region3: #{tpu_custom_call.1} parent=0 // loop_header
    %s9 = sphi 0, %s13
    %p10 = scmp.ge.s32.totalorder %s9, 4
    %s19 = sphi 0, %s21
    %s22 = sphi 0, %s19
    %s23 = sphi 0, %s22
    %s39 = sphi 0, %s23
    %s43 = sphi 0, %s43
    %s45 = sphi 0, %s43
    %s46 = sphi 0, %s45
    %s60 = sphi 0, %s46
    %s64 = sphi 0, %s64
    %s66 = sphi 0, %s64
    %s67 = sphi 0, %s66
    %s81 = sphi 0, %s67
    %s87 = sphi 0, %s89
    %s90 = sphi 0, %s87
    %s91 = sphi 0, %s90
    %s107 = sphi 0, %s91
  $region4: #{tpu_custom_call.1} parent=0 // loop_header_branch
    %12 = sbr.rel (%p10) target = $region8
  $region5: #{tpu_custom_call.1} parent=0 // loop_body
    %s14 = ssub.s32 %s9, 1
    %s15 = ssub.s32 %s9, 2
    %s16 = sadd.s32 %s9, 1
    %s17 = ssub.s32 %s9, %s16
    %p18 = scmp.eq.s32.totalorder %s17, 0
    %s20 = sadd.s32 %s19, 1
    %s21 = scalar_select %p18, %s19, %s20
    %p24 = pneg %p18
    %p25 = scmp.eq.s32.totalorder %s9, 1
    %p26 = por %p24, %p25
    %p27 = scmp.ne.s32.totalorder %s19, %s22
    %p28 = scmp.eq.s32.totalorder %s9, 0
    %p29 = por %p27, %p28
    %p30 = scmp.ne.s32.totalorder %s19, %s22
    %p31 = scmp.eq.s32.totalorder %s14, 1
    %p32 = por %p30, %p31
    %p33 = scmp.ne.s32.totalorder %s22, %s23
    %p34 = scmp.eq.s32.totalorder %s14, 0
    %p35 = por %p33, %p34
    %p36 = scmp.ne.s32.totalorder %s22, %s23
    %p37 = scmp.eq.s32.totalorder %s15, 1
    %p38 = por %p36, %p37
    %p40 = scmp.ne.s32.totalorder %s23, %s39
    %p41 = scmp.eq.s32.totalorder %s15, 0
    %p42 = por %p40, %p41
    %s44 = sadd.s32 %s43, 1
    %p47 = scmp.eq.s32.totalorder %s9, 1
    %p48 = scmp.ne.s32.totalorder %s43, %s45
    %p49 = scmp.eq.s32.totalorder %s9, 0
    %p50 = por %p48, %p49
    %p51 = scmp.ne.s32.totalorder %s43, %s45
    %p52 = scmp.eq.s32.totalorder %s14, 1
    %p53 = por %p51, %p52
    %p54 = scmp.ne.s32.totalorder %s45, %s46
    %p55 = scmp.eq.s32.totalorder %s14, 0
    %p56 = por %p54, %p55
    %p57 = scmp.ne.s32.totalorder %s45, %s46
    %p58 = scmp.eq.s32.totalorder %s15, 1
    %p59 = por %p57, %p58
    %p61 = scmp.ne.s32.totalorder %s46, %s60
    %p62 = scmp.eq.s32.totalorder %s15, 0
    %p63 = por %p61, %p62
    %s65 = sadd.s32 %s64, 1
    %p68 = scmp.eq.s32.totalorder %s9, 1
    %p69 = scmp.ne.s32.totalorder %s64, %s66
    %p70 = scmp.eq.s32.totalorder %s9, 0
    %p71 = por %p69, %p70
    %p72 = scmp.ne.s32.totalorder %s64, %s66
    %p73 = scmp.eq.s32.totalorder %s14, 1
    %p74 = por %p72, %p73
    %p75 = scmp.ne.s32.totalorder %s66, %s67
    %p76 = scmp.eq.s32.totalorder %s14, 0
    %p77 = por %p75, %p76
    %p78 = scmp.ne.s32.totalorder %s66, %s67
    %p79 = scmp.eq.s32.totalorder %s15, 1
    %p80 = por %p78, %p79
    %p82 = scmp.ne.s32.totalorder %s67, %s81
    %p83 = scmp.eq.s32.totalorder %s15, 0
    %p84 = por %p82, %p83
    %s85 = ssub.s32 %s9, %s16
    %p86 = scmp.eq.s32.totalorder %s85, 0
    %s88 = sadd.s32 %s87, 1
    %s89 = scalar_select %p86, %s87, %s88
    %p92 = pneg %p86
    %p93 = scmp.eq.s32.totalorder %s9, 1
    %p94 = por %p92, %p93
    %p95 = scmp.ne.s32.totalorder %s87, %s90
    %p96 = scmp.eq.s32.totalorder %s9, 0
    %p97 = por %p95, %p96
    %p98 = scmp.ne.s32.totalorder %s87, %s90
    %p99 = scmp.eq.s32.totalorder %s14, 1
    %p100 = por %p98, %p99
    %p101 = scmp.ne.s32.totalorder %s90, %s91
    %p102 = scmp.eq.s32.totalorder %s14, 0
    %p103 = por %p101, %p102
    %p104 = scmp.ne.s32.totalorder %s90, %s91
    %p105 = scmp.eq.s32.totalorder %s15, 1
    %p106 = por %p104, %p105
    %p108 = scmp.ne.s32.totalorder %s91, %s107
    %p109 = scmp.eq.s32.totalorder %s15, 0
    %p110 = por %p108, %p109
    %p111 = scmp.le.s32.totalorder 1, %s9
    %p112 = scmp.lt.s32.totalorder %s9, 3
    %p113 = pnand %p111, %p112
    %p114 = pneg %p113
    // Predicated region
    $region9: #{tpu_custom_call.1} parent=5 // pred_check
      _
    $region10: #{tpu_custom_call.1} parent=5 // pred_check_branch
      %116 = sbr.rel (%p113) target = $region12
    $region11: #{tpu_custom_call.1} parent=5 // pred_region
      %s117 = ssub.s32 %s9, 1
      // Predicated region
      $region13: #{tpu_custom_call.1} parent=11 // pred_check
        %p118 = pneg %p56
      $region14: #{tpu_custom_call.1} parent=11 // pred_check_branch
        %120 = sbr.rel (%p118) target = $region16
      $region15: #{tpu_custom_call.1} parent=11 // pred_region
        _
      $region16: #{tpu_custom_call.1} parent=11 // pred_fallthru
        _
      // Predicated region
      $region17: #{tpu_custom_call.1} parent=11 // pred_check
        %p121 = pneg %p77
      $region18: #{tpu_custom_call.1} parent=11 // pred_check_branch
        %123 = sbr.rel (%p121) target = $region20
      $region19: #{tpu_custom_call.1} parent=11 // pred_region
        _
      $region20: #{tpu_custom_call.1} parent=11 // pred_fallthru
        _
    $region12: #{tpu_custom_call.1} parent=5 // pred_fallthru
      _
    %p124 = scmp.lt.s32.totalorder %s9, 2
    // Predicated region
    $region21: #{tpu_custom_call.1} parent=5 // pred_check
      %p125 = pneg %p124
    $region22: #{tpu_custom_call.1} parent=5 // pred_check_branch
      %127 = sbr.rel (%p125) target = $region24
    $region23: #{tpu_custom_call.1} parent=5 // pred_region
      // Predicated region
      $region25: #{tpu_custom_call.1} parent=23 // pred_check
        %p128 = pneg %p29
      $region26: #{tpu_custom_call.1} parent=23 // pred_check_branch
        %130 = sbr.rel (%p128) target = $region28
      $region27: #{tpu_custom_call.1} parent=23 // pred_region
        %p131 = scmp.lt.s32.totalorder %s9, 1
        %s132 = scalar_select %p131, %s9, 1
        %s133 = smul.addr %s132, 3
        %s134 = smul.addr %s133, 4
        %s135 = scalar_lea.vmem %s0, %s134
      $region28: #{tpu_custom_call.1} parent=23 // pred_fallthru
        _
    $region24: #{tpu_custom_call.1} parent=5 // pred_fallthru
      _
    %p136 = scmp.le.s32.totalorder 1, %s9
    %p137 = scmp.lt.s32.totalorder %s9, 3
    %p138 = pnand %p136, %p137
    %p139 = pneg %p138
    // Predicated region
    $region29: #{tpu_custom_call.1} parent=5 // pred_check
      _
    $region30: #{tpu_custom_call.1} parent=5 // pred_check_branch
      %141 = sbr.rel (%p138) target = $region32
    $region31: #{tpu_custom_call.1} parent=5 // pred_region
      %s142 = ssub.s32 %s9, 1
      %p143 = scmp.lt.s32.totalorder %s14, 1
      %s144 = scalar_select %p143, %s14, 1
      %s145 = smul.addr %s144, 3
      %s146 = smul.addr %s145, 4
      %s147 = scalar_lea.vmem %s0, %s146
      %p148 = pneg %p35
      %p149 = pneg %p32
      %p150 = pneg %p56
      %p151 = pneg %p53
      %p152 = pneg %p77
      %p153 = pneg %p74
      %p154 = pneg %p103
      %p155 = pneg %p100
      %p156 = scmp.lt.s32.totalorder %s14, 1
      %s157 = scalar_select %p156, %s14, 1
      %s158 = smul.addr %s157, 3
      %s159 = smul.addr %s158, 4
      %s160 = scalar_lea.vmem %s3, %s159
      %p161 = scmp.lt.s32.totalorder %s14, 1
      %s162 = scalar_select %p161, %s14, 1
      %s163 = smul.addr %s162, 3
      %s164 = smul.addr %s163, 4
      %s165 = scalar_lea.vmem %s0, %s164
      %p166 = scmp.lt.s32.totalorder %s14, 1
      %s167 = scalar_select %p166, %s14, 1
      %s168 = smul.addr %s167, 3
      %s169 = smul.addr %s168, 4
      %s170 = scalar_lea.vmem %s3, %s169
      %v172 = vld [vmem:[%s165] sm:$0xf]
      %v173 = vld [vmem:[%s165 + $0x4] sm:$0xf]
      %v174 = vld [vmem:[%s165 + $0x8] sm:$0x3]
      %v178 = vunpack.c.l.b16 %v172
      %v179 = vunpack.c.l.b16 %v173
      %v180 = vunpack.c.l.b16 %v174
      %v181 = vpack.c.b16 %v179, %v178
      %v182 = vpack.c.b16 %v180, %v180
      %vm183 = vsmask.f32 7424
      %v185 = vshrl.u32 %v181, 16
      %v187 = vshll.u32 %v181, 16
      %v189 = vrot.slane %v187, 1
      %v190 = vor.u32 %v185, %v189
      %v192 = vshll.u32 %v182, 16
      %v194 = vrot.slane %v192, 1
      %v195 = vsel %vm183, %v190, %v194
      %v196 = vshrl.u32 %v182, 16
      %v198 = vor.u32 %v196, %v194
      %199 = vrot.lane.b32.xlu0 %v195, 32
      %v200 = vpop.permute.xlu0 %199
      %201 = vrot.lane.b32.xlu0 %v198, 32
      %v202 = vpop.permute.xlu0 %201
      %vm203 = vcmask 261120
      %v205 = vsel %vm203, %v181, %v200
      %v207 = vsel %vm203, %v182, %v202
      %v208 = vld [vmem:[%s1] sm:$0xf]
      %v209 = vld [vmem:[%s1 + $0x4] sm:$0xf]
      %v210 = vld [vmem:[%s1 + $0x8] sm:$0xf]
      %v211 = vld [vmem:[%s1 + $0xc] sm:$0xf]
      %v212 = vld [vmem:[%s1 + $0x10] sm:$0xf]
      %v213 = vld [vmem:[%s1 + $0x14] sm:$0xf]
      %v214 = vld [vmem:[%s1 + $0x18] sm:$0xf]
      %v215 = vld [vmem:[%s1 + $0x1c] sm:$0xf]
      %v216 = vld [vmem:[%s2] sm:$0x1]
      %v218 = vlaneseq
      %v219 = vshrl.u32 %v218, 7
      %v220 = vsub.s32 0, %v219
      %v221 = vrot.slane %v216, %v220
      %v231 = vunpack.c.l.b16 %v208
      %v232 = vunpack.c.l.b16 %v209
      %v233 = vunpack.c.l.b16 %v210
      %v234 = vunpack.c.l.b16 %v211
      %v235 = vunpack.c.l.b16 %v212
      %v236 = vunpack.c.l.b16 %v213
      %v237 = vunpack.c.l.b16 %v214
      %v238 = vunpack.c.l.b16 %v215
      %v239 = vpack.c.b16 %v232, %v231
      %v240 = vpack.c.b16 %v234, %v233
      %v241 = vpack.c.b16 %v236, %v235
      %v242 = vpack.c.b16 %v238, %v237
      %vm247 = vcmask 523264
      %v248 = vsel %vm247, %v205, 0
      %v250 = vsel %vm247, %v207, 0
      %252 = vmatprep.subr.bf16.mxu0 0
      %253 = vmatpush1.bf16.msra.mxu0 0
      %254 = vmatprep.subr.bf16.mxu0 0
      %255 = vmatpush1.bf16.msra.mxu0 0
      %256 = vmatprep.subr.bf16.mxu0 0
      %257 = vmatpush1.bf16.msra.mxu0 0
      %258 = vmatprep.subr.bf16.mxu0 0
      %259 = vmatpush1.bf16.msra.mxu0 0
      %260 = vmatprep.subr.bf16.mxu0 0
      %261 = vmatpush1.bf16.msra.mxu0 %v242
      %262 = vmatprep.subr.bf16.mxu0 0
      %263 = vmatpush1.bf16.msra.mxu0 %v241
      %264 = vmatprep.subr.bf16.mxu0 0
      %265 = vmatpush1.bf16.msra.mxu0 %v240
      %266 = vmatprep.subr.bf16.mxu0 0
      %267 = vmatpush1.bf16.msra.mxu0 %v239
      %268 = vmatprep.subr.bf16.mxu0 0
      %269 = vmatpush2.bf16.msra.mxu0 0
      %270 = vmatprep.subr.bf16.mxu0 0
      %271 = vmatpush2.bf16.msra.mxu0 0
      %272 = vmatprep.subr.bf16.mxu0 0
      %273 = vmatpush2.bf16.msra.mxu0 0
      %274 = vmatprep.subr.bf16.mxu0 0
      %275 = vmatpush2.bf16.msra.mxu0 0
      %276 = vmatprep.subr.bf16.mxu0 0
      %277 = vmatpush2.bf16.msra.mxu0 0
      %278 = vmatprep.subr.bf16.mxu0 0
      %279 = vmatpush2.bf16.msra.mxu0 0
      %280 = vmatprep.subr.bf16.mxu0 0
      %281 = vmatpush2.bf16.msra.mxu0 0
      %282 = vmatprep.subr.bf16.mxu0 0
      %283 = vmatpush2.bf16.msra.mxu0 0
      %284 = vmatprep.mubr.bf16.mxu0 0
      %285 = vmatmul.mubr.bf16.gmra.mxu0 %v248
      %v286 = vpop.f32.mrf.mxu0
      %v287 = vadd.f32 %v221, %v286
      %v288 = vpop.f32.mrf.mxu0
      %v289 = vpop.f32.mrf.mxu0
      %v290 = vadd.f32 %v221, %v289
      %v291 = vpop.f32.mrf.mxu0
      %292 = vmatprep.mubr.bf16.mxu0 0
      %293 = vmatmul.mubr.bf16.gmra.mxu0 %v250
      %v294 = vpop.f32.mrf.mxu0
      %v295 = vadd.f32 %v221, %v294
      %v296 = vpop.f32.mrf.mxu0
      %v297 = vpop.f32.mrf.mxu0
      %v298 = vpop.f32.mrf.mxu0
      %299 = vdwg.mxu0
      %v300 = vmul.f32 %v287, 0.5
      %v301 = vmul.f32 %v290, 0.5
      %v302 = vmul.f32 %v295, 0.5
      %v303 = vmul.f32 %v287, 0.044715
      %v304 = vmul.f32 %v290, 0.044715
      %v305 = vmul.f32 %v295, 0.044715
      %v306 = vmul.f32 %v303, %v287
      %v307 = vmul.f32 %v304, %v290
      %v308 = vmul.f32 %v305, %v295
      %v309 = vmul.f32 %v306, %v287
      %v310 = vmul.f32 %v307, %v290
      %v311 = vmul.f32 %v308, %v295
      %v312 = vadd.f32 %v287, %v309
      %v313 = vadd.f32 %v290, %v310
      %v314 = vadd.f32 %v295, %v311
      %v315 = vmul.f32 %v312, 0.7978846
      %v316 = vmul.f32 %v313, 0.7978846
      %v317 = vmul.f32 %v314, 0.7978846
      %v318 = vtanh.pop %v315
      %v319 = vtanh.pop %v316
      %v320 = vtanh.pop %v317
      %v321 = vadd.f32 %v318, 1.0
      %v322 = vadd.f32 %v319, 1.0
      %v323 = vadd.f32 %v320, 1.0
      %v324 = vmul.f32 %v300, %v321
      %v325 = vmul.f32 %v301, %v322
      %v326 = vmul.f32 %v302, %v323
      %v327 = vpack.c.bf16 %v325, %v324
      %v328 = vpack.c.bf16 %v326, %v326
      %v331 = vunpack.c.l.b16 %v327
      %v332 = vunpack.c.h.b16 %v327
      %v333 = vunpack.c.l.b16 %v328
      %v334 = vpack.c.b16 %v331, %v331
      %v335 = vpack.c.b16 %v332, %v332
      %v336 = vpack.c.b16 %v333, %v333
      %vm340 = vcmask 257024
      %341 = vst.msk [vmem:[%s170] sm:$0xf] %vm340, %v334
      %342 = vst.msk [vmem:[%s170 + $0x4] sm:$0xf] %vm340, %v335
      %vm343 = vcmask 254976
      %vm344 = vsmask.f32 1280
      %vm345 = vmand %vm343, %vm344
      %v346 = vld [vmem:[%s170 + $0x8] sm:$0x3]
      %v347 = vsel %vm345, %v336, %v346
      %348 = vst [vmem:[%s170 + $0x8] sm:$0x3] %v347
      %p349 = scmp.lt.s32.totalorder %s14, 1
      %s350 = scalar_select %p349, %s14, 1
      %s351 = smul.addr %s350, 3
      %s352 = smul.addr %s351, 4
      %s353 = scalar_lea.vmem %s3, %s352
      // Predicated region
      $region33: #{tpu_custom_call.1} parent=31 // pred_check
        %p354 = pneg %p100
      $region34: #{tpu_custom_call.1} parent=31 // pred_check_branch
        %356 = sbr.rel (%p354) target = $region36
      $region35: #{tpu_custom_call.1} parent=31 // pred_region
        _
      $region36: #{tpu_custom_call.1} parent=31 // pred_fallthru
        _
    $region32: #{tpu_custom_call.1} parent=5 // pred_fallthru
      _
    %p357 = scmp.le.s32.totalorder 2, %s9
    // Predicated region
    $region37: #{tpu_custom_call.1} parent=5 // pred_check
      %p358 = pneg %p357
    $region38: #{tpu_custom_call.1} parent=5 // pred_check_branch
      %360 = sbr.rel (%p358) target = $region40
    $region39: #{tpu_custom_call.1} parent=5 // pred_region
      %s361 = ssub.s32 %s9, 2
      // Predicated region
      $region41: #{tpu_custom_call.1} parent=39 // pred_check
        %p362 = pneg %p106
      $region42: #{tpu_custom_call.1} parent=39 // pred_check_branch
        %364 = sbr.rel (%p362) target = $region44
      $region43: #{tpu_custom_call.1} parent=39 // pred_region
        %p365 = scmp.lt.s32.totalorder %s15, 1
        %s366 = scalar_select %p365, %s15, 1
        %s367 = smul.addr %s366, 3
        %s368 = smul.addr %s367, 4
        %s369 = scalar_lea.vmem %s3, %s368
      $region44: #{tpu_custom_call.1} parent=39 // pred_fallthru
        _
    $region40: #{tpu_custom_call.1} parent=5 // pred_fallthru
      _
  $region6: #{tpu_custom_call.1} parent=0 // loop_footer
    %s13 = sadd.s32 1, %s9
  $region7: #{tpu_custom_call.1} parent=0 // loop_footer_branch
    %8 = sbr.rel target = $region3
  $region8: #{tpu_custom_call.1} parent=0 // loop_exit
    _

</llo_original>
